<compile_context>
chip_gen: v7x
topology: tpu7x:2x2x1
jax: 0.10.0
libtpu: 0.0.40
codegen_flags: <defaults>
</compile_context>

<pallas_src>
import jax
import jax.numpy as jnp
from jax.experimental import pallas as pl
from jax.experimental.pallas import tpu as pltpu


# ------------------------------- Linear kernel -------------------------------
def _linear_kernel(x_ref, w_ref, b_ref, o_ref):
    o_ref[...] = (
        jnp.dot(x_ref[...], w_ref[...], preferred_element_type=jnp.float32)
        + b_ref[...]
    ).astype(o_ref.dtype)


def linear_pallas(x, w_t, b, block_m=512):
    """x: (M, K), w_t: (K, N) (pre-transposed PyTorch weight), b: (1, N)."""
    M, K = x.shape
    N = w_t.shape[1]
    bm = min(block_m, M)
    return pl.pallas_call(
        _linear_kernel,
        out_shape=jax.ShapeDtypeStruct((M, N), jnp.float32),
        grid_spec=pltpu.PrefetchScalarGridSpec(
            num_scalar_prefetch=0,
            grid=(pl.cdiv(M, bm),),
            in_specs=[
                pl.BlockSpec((bm, K), lambda i: (i, 0)),
                pl.BlockSpec((K, N), lambda i: (0, 0)),
                pl.BlockSpec((1, N), lambda i: (0, 0)),
            ],
            out_specs=pl.BlockSpec((bm, N), lambda i: (i, 0)),
        ),
        compiler_params=pltpu.CompilerParams(dimension_semantics=("parallel",)),
    )(x, w_t, b)


# ----------------- Hoisted GRU input projection (all timesteps) ---------------
def _gates_proj_kernel(x_ref, wr_ref, wz_ref, wn_ref, br_ref, bz_ref, bn_ref,
                       gr_ref, gz_ref, gn_ref):
    x = x_ref[...]
    gr_ref[...] = (jnp.dot(x, wr_ref[...], preferred_element_type=jnp.float32)
                   + br_ref[...]).astype(gr_ref.dtype)
    gz_ref[...] = (jnp.dot(x, wz_ref[...], preferred_element_type=jnp.float32)
                   + bz_ref[...]).astype(gz_ref.dtype)
    gn_ref[...] = (jnp.dot(x, wn_ref[...], preferred_element_type=jnp.float32)
                   + bn_ref[...]).astype(gn_ref.dtype)


def gru_input_proj_pallas(x, w_r, w_z, w_n, b_r, b_z, b_n, block_m=512):
    """x: (M, K). Per-gate weights (K, H), per-gate biases (1, H). Returns 3x (M, H)."""
    M, K = x.shape
    H = w_r.shape[1]
    bm = min(block_m, M)
    x_spec = pl.BlockSpec((bm, K), lambda i: (i, 0))
    w_spec = pl.BlockSpec((K, H), lambda i: (0, 0))
    b_spec = pl.BlockSpec((1, H), lambda i: (0, 0))
    o_spec = pl.BlockSpec((bm, H), lambda i: (i, 0))
    out_sd = jax.ShapeDtypeStruct((M, H), jnp.float32)
    return pl.pallas_call(
        _gates_proj_kernel,
        out_shape=(out_sd, out_sd, out_sd),
        grid_spec=pltpu.PrefetchScalarGridSpec(
            num_scalar_prefetch=0,
            grid=(pl.cdiv(M, bm),),
            in_specs=[x_spec, w_spec, w_spec, w_spec, b_spec, b_spec, b_spec],
            out_specs=[o_spec, o_spec, o_spec],
        ),
        compiler_params=pltpu.CompilerParams(dimension_semantics=("parallel",)),
    )(x, w_r, w_z, w_n, b_r, b_z, b_n)


# ----------------------- GRU recurrence (time-chunked) ------------------------
def _make_gru_recurrence_kernel(t_chunk, store_seq):
    def kernel(gi_r_ref, gi_z_ref, gi_n_ref,
               w_r_ref, w_z_ref, w_n_ref, b_hn_ref, *out_refs):
        if store_seq:
            out_ref, hN_ref = out_refs
        else:
            (hN_ref,) = out_refs

        # hN_ref has a constant block index -> VMEM-resident across the time grid;
        # it doubles as the hidden-state carry (no separate scratch buffer).
        @pl.when(pl.program_id(0) == 0)
        def _():
            hN_ref[...] = jnp.zeros_like(hN_ref)

        w_r = w_r_ref[...]
        w_z = w_z_ref[...]
        w_n = w_n_ref[...]
        b_hn = b_hn_ref[...]

        h = hN_ref[...]
        # t_chunk is a small static value -> fully unrolled, static indices.
        for t in range(t_chunk):
            h_r = jnp.dot(h, w_r, preferred_element_type=jnp.float32)
            h_z = jnp.dot(h, w_z, preferred_element_type=jnp.float32)
            h_n = jnp.dot(h, w_n, preferred_element_type=jnp.float32) + b_hn
            r = jax.nn.sigmoid(gi_r_ref[t] + h_r)
            z = jax.nn.sigmoid(gi_z_ref[t] + h_z)
            n = jnp.tanh(gi_n_ref[t] + r * h_n)
            h = (1.0 - z) * n + z * h
            if store_seq:
                out_ref[t] = h.astype(out_ref.dtype)
        hN_ref[...] = h  # one carry store per chunk (not per timestep)

    return kernel


def _pick_time_chunk(S, max_chunk=16):
    c = min(S, max_chunk)
    while S % c:
        c -= 1
    return c


def gru_recurrence_pallas(gi_r, gi_z, gi_n, w_hh_r, w_hh_z, w_hh_n, b_hh_n,
                          store_seq=True, max_chunk=16):
    """gi_*: (S, B, H) precomputed input projections (b_ih + b_hh_{r,z} folded in,
    b_ih_n folded into gi_n). w_hh_*: (H, H). b_hh_n: (1, H)."""
    S, B, H = gi_r.shape
    t_chunk = _pick_time_chunk(S, max_chunk)
    n_chunks = S // t_chunk

    gi_spec = pl.BlockSpec((t_chunk, B, H), lambda c: (c, 0, 0))
    w_spec = pl.BlockSpec((H, H), lambda c: (0, 0))
    b_spec = pl.BlockSpec((1, H), lambda c: (0, 0))
    hN_spec = pl.BlockSpec((B, H), lambda c: (0, 0))

    if store_seq:
        out_shape = (jax.ShapeDtypeStruct((S, B, H), jnp.float32),
                     jax.ShapeDtypeStruct((B, H), jnp.float32))
        out_specs = [pl.BlockSpec((t_chunk, B, H), lambda c: (c, 0, 0)), hN_spec]
    else:
        out_shape = jax.ShapeDtypeStruct((B, H), jnp.float32)
        out_specs = hN_spec

    kernel = _make_gru_recurrence_kernel(t_chunk, store_seq)
    return pl.pallas_call(
        kernel,
        out_shape=out_shape,
        grid_spec=pltpu.PrefetchScalarGridSpec(
            num_scalar_prefetch=0,
            grid=(n_chunks,),
            in_specs=[gi_spec, gi_spec, gi_spec, w_spec, w_spec, w_spec, b_spec],
            out_specs=out_specs,
        ),
        compiler_params=pltpu.CompilerParams(
            dimension_semantics=("arbitrary",),
            vmem_limit_bytes=64 * 1024 * 1024,
        ),
    )(gi_r, gi_z, gi_n, w_hh_r, w_hh_z, w_hh_n, b_hh_n)


# ------------------------------ Full forward ----------------------------------
def char_rnn_forward(x, hidden_unused, params):
    """x: (batch, seq, n_inputs). Returns (output[-1] of shape (batch, n_output),
    hidden of shape (n_layers, batch, n_hidden))."""
    del hidden_unused  # forward() re-creates hidden as zeros
    xt = jnp.transpose(x, (1, 0, 2))  # (seq, batch, n_inputs)
    S, B, I = xt.shape
    H = params["n_hidden"]
    L = params["n_layers"]

    # Encoder: one big (S*B, I) x (I, H) matmul.
    # (For layer 0 this could be fused algebraically into the gate projection since
    # there is no nonlinearity in between; kept separate for clarity.)
    layer_in_flat = linear_pallas(xt.reshape(S * B, I),
                                  params["enc_w_t"], params["enc_b"])

    hs = []
    for l in range(L):
        # Hoisted input projection over ALL timesteps (off the serial path).
        b_r = params["b_ih_r"][l] + params["b_hh_r"][l]
        b_z = params["b_ih_z"][l] + params["b_hh_z"][l]
        b_n = params["b_ih_n"][l]
        gi_r, gi_z, gi_n = gru_input_proj_pallas(
            layer_in_flat,
            params["w_ih_r_t"][l], params["w_ih_z_t"][l], params["w_ih_n_t"][l],
            b_r, b_z, b_n)
        gi_r = gi_r.reshape(S, B, H)
        gi_z = gi_z.reshape(S, B, H)
        gi_n = gi_n.reshape(S, B, H)

        is_last = (l == L - 1)
        if is_last:
            # Last layer: the decoder only needs outhist[-1] == final hidden of the
            # top layer, so skip emitting the full (S, B, H) sequence to HBM.
            hN = gru_recurrence_pallas(
                gi_r, gi_z, gi_n,
                params["w_hh_r_t"][l], params["w_hh_z_t"][l], params["w_hh_n_t"][l],
                params["b_hh_n"][l], store_seq=False)
        else:
            seq, hN = gru_recurrence_pallas(
                gi_r, gi_z, gi_n,
                params["w_hh_r_t"][l], params["w_hh_z_t"][l], params["w_hh_n_t"][l],
                params["b_hh_n"][l], store_seq=True)
            layer_in_flat = seq.reshape(S * B, H)
        hs.append(hN)

    hidden = jnp.stack(hs, axis=0)  # (n_layers, B, H)

    # decoder(outhist)[-1] == decoder(final hidden of the top layer)
    out_last = linear_pallas(hs[-1], params["dec_w_t"], params["dec_b"])
    return out_last, hidden


# ------------------------------ Parameters -------------------------------------
def init_params(key, n_inputs, n_hidden, n_output, n_layers):
    def uni(k, shape, fan):
        bound = 1.0 / jnp.sqrt(jnp.float32(fan))
        return jax.random.uniform(k, shape, jnp.float32, -bound, bound)

    keys = jax.random.split(key, 4 + 12 * n_layers)
    params = {
        "n_hidden": n_hidden,
        "n_layers": n_layers,
        # nn.Linear(n_inputs, n_hidden): weight (H, I) stored transposed as (I, H)
        "enc_w_t": uni(keys[0], (n_inputs, n_hidden), n_inputs),
        "enc_b": uni(keys[1], (1, n_hidden), n_inputs),
        # nn.Linear(n_hidden, n_output)
        "dec_w_t": uni(keys[2], (n_hidden, n_output), n_hidden),
        "dec_b": uni(keys[3], (1, n_output), n_hidden),
        # GRU weights stored PER GATE (r, z, n), pre-transposed to (in, H) / (H, H)
        # so gate extraction in the kernels is lane-aligned (no (H,3H) slicing).
        "w_ih_r_t": [], "w_ih_z_t": [], "w_ih_n_t": [],
        "w_hh_r_t": [], "w_hh_z_t": [], "w_hh_n_t": [],
        "b_ih_r": [], "b_ih_z": [], "b_ih_n": [],
        "b_hh_r": [], "b_hh_z": [], "b_hh_n": [],
    }
    idx = 4
    H = n_hidden
    for _ in range(n_layers):
        ks = keys[idx:idx + 12]
        idx += 12
        in_size = n_hidden  # GRU(n_hidden, n_hidden, n_layers): all layers H->H
        params["w_ih_r_t"].append(uni(ks[0], (in_size, H), H))
        params["w_ih_z_t"].append(uni(ks[1], (in_size, H), H))
        params["w_ih_n_t"].append(uni(ks[2], (in_size, H), H))
        params["w_hh_r_t"].append(uni(ks[3], (H, H), H))
        params["w_hh_z_t"].append(uni(ks[4], (H, H), H))
        params["w_hh_n_t"].append(uni(ks[5], (H, H), H))
        params["b_ih_r"].append(uni(ks[6], (1, H), H))
        params["b_ih_z"].append(uni(ks[7], (1, H), H))
        params["b_ih_n"].append(uni(ks[8], (1, H), H))
        params["b_hh_r"].append(uni(ks[9], (1, H), H))
        params["b_hh_z"].append(uni(ks[10], (1, H), H))
        params["b_hh_n"].append(uni(ks[11], (1, H), H))
    return params


# ------------------------------ Pure-JAX reference ------------------------------
def ref_forward(x, params):
    xt = jnp.transpose(x, (1, 0, 2))
    S, B, _ = xt.shape
    H = params["n_hidden"]
    layer_in = xt @ params["enc_w_t"] + params["enc_b"]
    hs = []
    for l in range(params["n_layers"]):
        h = jnp.zeros((B, H), jnp.float32)
        outs = []
        for t in range(S):
            x_t = layer_in[t]
            i_r = x_t @ params["w_ih_r_t"][l] + params["b_ih_r"][l]
            i_z = x_t @ params["w_ih_z_t"][l] + params["b_ih_z"][l]
            i_n = x_t @ params["w_ih_n_t"][l] + params["b_ih_n"][l]
            h_r = h @ params["w_hh_r_t"][l] + params["b_hh_r"][l]
            h_z = h @ params["w_hh_z_t"][l] + params["b_hh_z"][l]
            h_n = h @ params["w_hh_n_t"][l] + params["b_hh_n"][l]
            r = jax.nn.sigmoid(i_r + h_r)
            z = jax.nn.sigmoid(i_z + h_z)
            n = jnp.tanh(i_n + r * h_n)
            h = (1.0 - z) * n + z * h
            outs.append(h)
        layer_in = jnp.stack(outs, axis=0)
        hs.append(h)
    hidden = jnp.stack(hs, axis=0)
    out_last = layer_in[-1] @ params["dec_w_t"] + params["dec_b"]
    return out_last, hidden


if __name__ == "__main__":
    batch, seq = 2, 8
    n_inputs, n_hidden, n_output, n_layers = 16, 32, 16, 2

    key = jax.random.PRNGKey(0)
    kx, kp = jax.random.split(key)
    x = jax.random.normal(kx, (batch, seq, n_inputs), jnp.float32)
    hidden_in = jnp.zeros((n_layers, batch, n_hidden), jnp.float32)  # ignored by forward
    params = init_params(kp, n_inputs, n_hidden, n_output, n_layers)

    out, hidden = char_rnn_forward(x, hidden_in, params)
    jax.block_until_ready((out, hidden))

    ref_out, ref_hidden = ref_forward(x, params)
    assert out.shape == (batch, n_output) and hidden.shape == (n_layers, batch, n_hidden)
    assert jnp.allclose(out, ref_out, atol=2e-3, rtol=2e-3)
    assert jnp.allclose(hidden, ref_hidden, atol=2e-3, rtol=2e-3)

    print("KERNEL_OK")
</pallas_src>

<mosaic_0001>
module attributes {stable_mosaic.version = 11 : i64} {
  func.func @_linear_kernel(%arg0: i32, %arg1: memref<16x16xf32, #tpu.memory_space<vmem>>, %arg2: memref<16x32xf32, #tpu.memory_space<vmem>>, %arg3: memref<1x32xf32, #tpu.memory_space<vmem>>, %arg4: memref<16x32xf32, #tpu.memory_space<vmem>>) attributes {dimension_semantics = [#tpu.dimension_semantics<parallel>], iteration_bounds = array<i64: 1>, scalar_prefetch = 0 : i64, scratch_operands = 0 : i64, tpu.core_type = #tpu.core_type<tc>, window_params = [{transform_indices = @transform_0, window_bounds = array<i64: 16, 16>}, {pipeline_mode = #tpu.pipeline_mode<synchronous>, transform_indices = @transform_1, window_bounds = array<i64: 16, 32>}, {pipeline_mode = #tpu.pipeline_mode<synchronous>, transform_indices = @transform_2, window_bounds = array<i64: 1, 32>}, {transform_indices = @transform_3, window_bounds = array<i64: 16, 32>}]} {
    %c0 = arith.constant 0 : index
    %c0_0 = arith.constant 0 : index
    %0 = vector.load %arg1[%c0, %c0_0] : memref<16x16xf32, #tpu.memory_space<vmem>>, vector<16x16xf32>
    %c0_1 = arith.constant 0 : index
    %c0_2 = arith.constant 0 : index
    %1 = vector.load %arg2[%c0_1, %c0_2] : memref<16x32xf32, #tpu.memory_space<vmem>>, vector<16x32xf32>
    %cst = arith.constant dense<0.000000e+00> : vector<16x32xf32>
    %2 = tpu.matmul %0, %1, %cst {dimension_numbers = #tpu.dot_dimension_numbers<[1], [0], [0], [1], [0, 0, 1, 1], [], []>} : vector<16x16xf32>, vector<16x32xf32>, vector<16x32xf32> -> vector<16x32xf32>
    %c0_3 = arith.constant 0 : index
    %c0_4 = arith.constant 0 : index
    %3 = vector.load %arg3[%c0_3, %c0_4] : memref<1x32xf32, #tpu.memory_space<vmem>>, vector<1x32xf32>
    %4 = vector.broadcast %3 : vector<1x32xf32> to vector<16x32xf32>
    %5 = arith.addf %2, %4 : vector<16x32xf32>
    %c0_5 = arith.constant 0 : index
    %c0_6 = arith.constant 0 : index
    %6 = vector.load %arg4[%c0_5, %c0_6] : memref<16x32xf32, #tpu.memory_space<vmem>>, vector<16x32xf32>
    tpu.vector_store %arg4[%c0_5, %c0_6], %5 {strides = array<i32>} : memref<16x32xf32, #tpu.memory_space<vmem>>, vector<16x32xf32>,
    return
  }
  func.func @transform_0(%arg0: i32) -> (i32, i32) {
    %c0_i32 = arith.constant 0 : i32
    %c0_i32_0 = arith.constant 0 : i32
    return %arg0, %c0_i32 : i32, i32
  }
  func.func @transform_1(%arg0: i32) -> (i32, i32) {
    %c0_i32 = arith.constant 0 : i32
    %c0_i32_0 = arith.constant 0 : i32
    %c0_i32_1 = arith.constant 0 : i32
    return %c0_i32, %c0_i32_0 : i32, i32
  }
  func.func @transform_2(%arg0: i32) -> (i32, i32) {
    %c0_i32 = arith.constant 0 : i32
    %c0_i32_0 = arith.constant 0 : i32
    %c0_i32_1 = arith.constant 0 : i32
    return %c0_i32, %c0_i32_0 : i32, i32
  }
  func.func @transform_3(%arg0: i32) -> (i32, i32) {
    %c0_i32 = arith.constant 0 : i32
    %c0_i32_0 = arith.constant 0 : i32
    return %arg0, %c0_i32 : i32, i32
  }
}

</mosaic_0001>

<llo_original>
// kernel: tpu_custom_call.1
$region0: #{tpu_custom_call.1}
  #allocation0 [shape = 'u32[]', space=smem, size = 0x4, offset = 0x4, fixed_abs, tag = 'smem constant byte address 0x4 - core index']
  #allocation1 [shape = 'u32[144,128]{1,0:T(1,128)}', space=vmem, size = 0x12000, scoped, tag = 'internal scratch']
  %s0 = inlined_call_operand.hbm [shape: f32[16,16], index: 0, kind: input, shape index: {}]
  %s1 = inlined_call_operand.hbm [shape: f32[16,32], index: 1, kind: input, shape index: {}]
  %s2 = inlined_call_operand.vmem [shape: f32[1,32], index: 2, kind: input, shape index: {}]
  %s3 = inlined_call_operand.hbm [shape: f32[16,32], index: 3, kind: output, shape index: {}]
  %s4 = sld [smem:[#allocation0]]
  $region30: #{tpu_custom_call.1} parent=0
    _
  %s6 = ssub.s32 1, %s4
  %s7 = scalar_select 0, %s6, %s4
  $region1: #{tpu_custom_call.1} parent=0
    #allocation2 [shape = 'u8[8192]{0}', space=vmem, size = 0x2000, scoped, tag = 'input window, operand 0, single buffered']
    #allocation3 [shape = 's32[1]{0}', space=sflag, size = 0x4, scoped, tag = 'scoped memory for tpu_custom_call.1']
    #allocation4 [shape = 's32[1]{0}', space=sflag, size = 0x4, scoped, tag = 'scoped memory for tpu_custom_call.1']
    #allocation5 [shape = 'u8[8192]{0}', space=vmem, size = 0x2000, scoped, tag = 'input window, operand 1, single buffered']
    #allocation6 [shape = 's32[1]{0}', space=sflag, size = 0x4, scoped, tag = 'scoped memory for tpu_custom_call.1']
    #allocation7 [shape = 'u8[8192]{0}', space=vmem, size = 0x2000, scoped, tag = 'output window, operand 0, single buffered']
    %8 = vsyncpa [#allocation3], 0
    %9 = vsyncpa [#allocation6], 0
    %10 = vsyncpa [#allocation4], 0
    // Predicated region
    $region2: #{tpu_custom_call.1} parent=1 // pred_check
      _
    $region3: #{tpu_custom_call.1} parent=1 // pred_check_branch
      %12 = sbr.rel (0) target = $region5
    $region4: #{tpu_custom_call.1} parent=1 // pred_region
      %s14 = ssub.s32 256, 256
      %15 = vsyncadd [#allocation3], %s14
      %s16 = sshll.u32 [#allocation2], 4
      %s17 = int_to_ptr.vmem [resolvable:$true] %s16
      %22 = dma.hbm_to_vmem [thread:$0]  %s0, 256, %s17, [#allocation3], 128, 128, 8
    $region5: #{tpu_custom_call.1} parent=1 // pred_fallthru
      _
    // Predicated region
    $region6: #{tpu_custom_call.1} parent=1 // pred_check
      _
    $region7: #{tpu_custom_call.1} parent=1 // pred_check_branch
      %24 = sbr.rel (0) target = $region9
    $region8: #{tpu_custom_call.1} parent=1 // pred_region
      %s26 = ssub.s32 256, 256
      %27 = vsyncadd [#allocation6], %s26
      %s28 = sshll.u32 [#allocation5], 4
      %s29 = int_to_ptr.vmem [resolvable:$true] %s28
      %34 = dma.hbm_to_vmem [thread:$0]  %s1, 256, %s29, [#allocation6], 128, 128, 8
    $region9: #{tpu_custom_call.1} parent=1 // pred_fallthru
      _
    // Predicated region
    $region10: #{tpu_custom_call.1} parent=1 // pred_check
      _
    $region11: #{tpu_custom_call.1} parent=1 // pred_check_branch
      %36 = sbr.rel (0) target = $region13
    $region12: #{tpu_custom_call.1} parent=1 // pred_region
      _
    $region13: #{tpu_custom_call.1} parent=1 // pred_fallthru
      _
    // Predicated region
    $region14: #{tpu_custom_call.1} parent=1 // pred_check
      _
    $region15: #{tpu_custom_call.1} parent=1 // pred_check_branch
      %38 = sbr.rel (0) target = $region17
    $region16: #{tpu_custom_call.1} parent=1 // pred_region
      %39 = dma.done [#allocation3], 256
    $region17: #{tpu_custom_call.1} parent=1 // pred_fallthru
      _
    // Predicated region
    $region18: #{tpu_custom_call.1} parent=1 // pred_check
      _
    $region19: #{tpu_custom_call.1} parent=1 // pred_check_branch
      %41 = sbr.rel (0) target = $region21
    $region20: #{tpu_custom_call.1} parent=1 // pred_region
      %42 = dma.done [#allocation6], 256
    $region21: #{tpu_custom_call.1} parent=1 // pred_fallthru
      _
    %v43 = vld [vmem:[#allocation2] sm:$0xff]
    %v44 = vld [vmem:[#allocation2 + $0x8] sm:$0xff]
    %v45 = vld [vmem:[#allocation5] sm:$0xff]
    %v46 = vld [vmem:[#allocation5 + $0x8] sm:$0xff]
    %v47 = vld [vmem:[%s2] sm:$0x1]
    %v49 = vlaneseq
    %v50 = vshrl.u32 %v49, 7
    %v51 = vsub.s32 0, %v50
    %v52 = vrot.slane %v47, %v51
    %vm54 = vcmask 130048
    %v56 = vsel %vm54, %v43, 0
    %v59 = vsel %vm54, %v44, 0
    %61 = vmatprep.subr.mxu0 0.0
    %62 = vmatpush1.msra.mxu0 %v45
    %63 = vmatprep.subr.mxu0 0.0
    %64 = vmatpush1.msra.mxu0 %v46
    %65 = vmatprep.subr.mxu0 0.0
    %66 = vmatpush1.msra.mxu0 0.0
    %67 = vmatprep.subr.mxu0 0.0
    %68 = vmatpush1.msra.mxu0 0.0
    %69 = vmatprep.subr.mxu0 0.0
    %70 = vmatpush1.msra.mxu0 0.0
    %71 = vmatprep.subr.mxu0 0.0
    %72 = vmatpush1.msra.mxu0 0.0
    %73 = vmatprep.subr.mxu0 0.0
    %74 = vmatpush1.msra.mxu0 0.0
    %75 = vmatprep.subr.mxu0 0.0
    %76 = vmatpush1.msra.mxu0 0.0
    %77 = vmatprep.subr.mxu0 0.0
    %78 = vmatpush1.msra.mxu0 0.0
    %79 = vmatprep.subr.mxu0 0.0
    %80 = vmatpush1.msra.mxu0 0.0
    %81 = vmatprep.subr.mxu0 0.0
    %82 = vmatpush1.msra.mxu0 0.0
    %83 = vmatprep.subr.mxu0 0.0
    %84 = vmatpush1.msra.mxu0 0.0
    %85 = vmatprep.subr.mxu0 0.0
    %86 = vmatpush1.msra.mxu0 0.0
    %87 = vmatprep.subr.mxu0 0.0
    %88 = vmatpush1.msra.mxu0 0.0
    %89 = vmatprep.subr.mxu0 0.0
    %90 = vmatpush1.msra.mxu0 0.0
    %91 = vmatprep.subr.mxu0 0.0
    %92 = vmatpush1.msra.mxu0 0.0
    %93 = vmatprep.subr.mxu0 0.0
    %94 = vmatpush1.msra.mxu0 0.0
    %95 = vmatprep.subr.mxu0 0.0
    %96 = vmatpush1.msra.mxu0 0.0
    %97 = vmatprep.subr.mxu0 0.0
    %98 = vmatpush1.msra.mxu0 0.0
    %99 = vmatprep.subr.mxu0 0.0
    %100 = vmatpush1.msra.mxu0 0.0
    %101 = vmatprep.subr.mxu0 0.0
    %102 = vmatpush1.msra.mxu0 0.0
    %103 = vmatprep.subr.mxu0 0.0
    %104 = vmatpush1.msra.mxu0 0.0
    %105 = vmatprep.subr.mxu0 0.0
    %106 = vmatpush1.msra.mxu0 0.0
    %107 = vmatprep.subr.mxu0 0.0
    %108 = vmatpush1.msra.mxu0 0.0
    %109 = vmatprep.subr.mxu0 0.0
    %110 = vmatpush1.msra.mxu0 0.0
    %111 = vmatprep.subr.mxu0 0.0
    %112 = vmatpush1.msra.mxu0 0.0
    %113 = vmatprep.subr.mxu0 0.0
    %114 = vmatpush1.msra.mxu0 0.0
    %115 = vmatprep.subr.mxu0 0.0
    %116 = vmatpush1.msra.mxu0 0.0
    %117 = vmatprep.subr.mxu0 0.0
    %118 = vmatpush1.msra.mxu0 0.0
    %119 = vmatprep.subr.mxu0 0.0
    %120 = vmatpush1.msra.mxu0 0.0
    %121 = vmatprep.subr.mxu0 0.0
    %122 = vmatpush1.msra.mxu0 0.0
    %123 = vmatprep.subr.mxu0 0.0
    %124 = vmatpush1.msra.mxu0 0.0
    %125 = vmatprep.mubr.f32.mxu0 0.0
    %126 = vmatmul.mubr.f32.gmra.mrb[0].mxu0 %v56
    %v127 = vpop.f32.mrb[0].mxu0
    %v128 = vadd.f32 %v52, %v127
    %v129 = vpop.f32.mrb[0].mxu0
    %130 = vmatprep.mubr.f32.mxu0 0.0
    %131 = vmatmul.mubr.f32.gmra.mrb[0].mxu0 %v59
    %v132 = vpop.f32.mrb[0].mxu0
    %v133 = vadd.f32 %v52, %v132
    %v134 = vpop.f32.mrb[0].mxu0
    %135 = vdwg.mxu0
    %vm136 = vcmask 261120
    %137 = vst.msk [vmem:[#allocation7] sm:$0xff] %vm136, %v128
    %138 = vst.msk [vmem:[#allocation7 + $0x8] sm:$0xff] %vm136, %v133
    // Predicated region
    $region22: #{tpu_custom_call.1} parent=1 // pred_check
      _
    $region23: #{tpu_custom_call.1} parent=1 // pred_check_branch
      %140 = sbr.rel (0) target = $region25
    $region24: #{tpu_custom_call.1} parent=1 // pred_region
      %s142 = ssub.s32 256, 256
      %143 = vsyncadd [#allocation4], %s142
      %s144 = sshll.u32 [#allocation7], 4
      %s145 = int_to_ptr.vmem [resolvable:$true] %s144
      %150 = dma.vmem_to_hbm [thread:$0]  %s145, 256, %s3, [#allocation4], 128, 128, 8
    $region25: #{tpu_custom_call.1} parent=1 // pred_fallthru
      _
    // Predicated region
    $region26: #{tpu_custom_call.1} parent=1 // pred_check
      _
    $region27: #{tpu_custom_call.1} parent=1 // pred_check_branch
      %152 = sbr.rel (0) target = $region29
    $region28: #{tpu_custom_call.1} parent=1 // pred_region
      %153 = dma.done [#allocation4], 256
    $region29: #{tpu_custom_call.1} parent=1 // pred_fallthru
      _
    %154 = vsyncpa [#allocation3], 1
    %155 = vsyncpa [#allocation6], 1
    %156 = vsyncpa [#allocation4], 1

</llo_original>
